<compile_context>
chip_gen: v6e
topology: v6e:2x2x1
jax: 0.10.0
libtpu: 0.0.40
codegen_flags: <defaults>
</compile_context>

<pallas_src>
import functools

import jax
import jax.numpy as jnp
from jax.experimental import pallas as pl
from jax.experimental.pallas import tpu as pltpu

BN_EPS = 1e-5
LRELU_SLOPE = 0.2
TM_MAX = 512  # M-tile rows; 2*(TM*K*2B + TM*Cout*2B) stays << 24 MiB for all layers


def _round_up(x, m):
    return (x + m - 1) // m * m


# ---------------------------------------------------------------------------
# Pallas kernels
# ---------------------------------------------------------------------------
def _matmul_stats_kernel(x_ref, w_ref, y_ref, sum_ref, sq_ref):
    """Pass 1: y = X @ W (bf16 x bf16 -> f32 acc) per M-tile.

    Writes the pre-BN activation tile (bf16) and accumulates per-channel
    sum / sum-of-squares into VMEM-resident (1, Cout) output accumulators
    across the M grid axis (grid axis must be 'arbitrary').
    Padded (all-zero) rows contribute 0 to both sums, so stats stay exact.
    """
    @pl.when(pl.program_id(0) == 0)
    def _():
        sum_ref[...] = jnp.zeros_like(sum_ref)
        sq_ref[...] = jnp.zeros_like(sq_ref)

    y = jnp.dot(x_ref[...], w_ref[...], preferred_element_type=jnp.float32)
    y_ref[...] = y.astype(y_ref.dtype)
    sum_ref[...] += jnp.sum(y, axis=0, keepdims=True)
    sq_ref[...] += jnp.sum(y * y, axis=0, keepdims=True)


def _bn_scale_shift(sum_ref, sq_ref, gamma_ref, beta_ref, inv_m):
    """Fold BN(batch stats) into a single per-channel scale/shift (f32)."""
    mean = sum_ref[...] * inv_m
    var = jnp.maximum(sq_ref[...] * inv_m - mean * mean, 0.0)
    scale = gamma_ref[...] * jax.lax.rsqrt(var + BN_EPS)
    shift = beta_ref[...] - mean * scale
    return scale, shift


def _bn_lrelu_kernel(y_ref, sum_ref, sq_ref, gamma_ref, beta_ref, o_ref, *, inv_m):
    """Pass 2: normalize + LeakyReLU(0.2) per M-tile (grid axis 'parallel')."""
    scale, shift = _bn_scale_shift(sum_ref, sq_ref, gamma_ref, beta_ref, inv_m)
    y = y_ref[...].astype(jnp.float32) * scale + shift
    o_ref[...] = jnp.where(y > 0, y, LRELU_SLOPE * y).astype(o_ref.dtype)


def _bn_lrelu_cls_kernel(y_ref, sum_ref, sq_ref, gamma_ref, beta_ref,
                         cw_ref, cb_ref, o_ref, *, inv_m):
    """Pass 2 of the joint conv with the 1x1 classifier fused in the epilogue.

    cw_ref is the classifier weight laid out as (1, Cout); the 1x1 conv is a
    per-row multiply + lane reduction, avoiding a separate pallas_call and the
    HBM round-trip of the (M, Cout) joint activation.
    """
    scale, shift = _bn_scale_shift(sum_ref, sq_ref, gamma_ref, beta_ref, inv_m)
    y = y_ref[...].astype(jnp.float32) * scale + shift
    a = jnp.where(y > 0, y, LRELU_SLOPE * y)
    o_ref[...] = jnp.sum(a * cw_ref[...], axis=1, keepdims=True) + cb_ref[...]


# ---------------------------------------------------------------------------
# Pallas wrappers (M-tiled pallas_call plumbing)
# ---------------------------------------------------------------------------
def _tile_rows(cols):
    """Pick an M tile and zero-pad rows so M_pad % tm == 0 (tm % 8 == 0)."""
    m_true = cols.shape[0]
    tm = min(TM_MAX, _round_up(m_true, 8))
    m_pad = _round_up(m_true, tm)
    if m_pad != m_true:
        cols = jnp.pad(cols, ((0, m_pad - m_true), (0, 0)))
    return cols, m_true, tm, m_pad


def _pass1_matmul_stats(cols, w, tm, grid):
    m_pad, k = cols.shape
    cout = w.shape[1]
    return pl.pallas_call(
        _matmul_stats_kernel,
        out_shape=(jax.ShapeDtypeStruct((m_pad, cout), jnp.bfloat16),
                   jax.ShapeDtypeStruct((1, cout), jnp.float32),
                   jax.ShapeDtypeStruct((1, cout), jnp.float32)),
        grid=grid,
        in_specs=[pl.BlockSpec((tm, k), lambda i: (i, 0)),
                  pl.BlockSpec((k, cout), lambda i: (0, 0))],
        out_specs=(pl.BlockSpec((tm, cout), lambda i: (i, 0)),
                   pl.BlockSpec((1, cout), lambda i: (0, 0)),
                   pl.BlockSpec((1, cout), lambda i: (0, 0))),
        compiler_params=pltpu.CompilerParams(
            dimension_semantics=("arbitrary",)),  # stats accumulate across M
    )(cols, w)


def conv_bn_lrelu(cols, w, gamma, beta):
    """Conv (as matmul) -> BatchNorm2d(batch stats) -> LeakyReLU(0.2)."""
    cols, m_true, tm, m_pad = _tile_rows(cols)
    cout = w.shape[1]
    grid = (m_pad // tm,)

    y, ssum, ssq = _pass1_matmul_stats(cols, w, tm, grid)

    out = pl.pallas_call(
        functools.partial(_bn_lrelu_kernel, inv_m=1.0 / float(m_true)),
        out_shape=jax.ShapeDtypeStruct((m_pad, cout), jnp.bfloat16),
        grid=grid,
        in_specs=[pl.BlockSpec((tm, cout), lambda i: (i, 0)),
                  pl.BlockSpec((1, cout), lambda i: (0, 0)),
                  pl.BlockSpec((1, cout), lambda i: (0, 0)),
                  pl.BlockSpec((1, cout), lambda i: (0, 0)),
                  pl.BlockSpec((1, cout), lambda i: (0, 0))],
        out_specs=pl.BlockSpec((tm, cout), lambda i: (i, 0)),
        compiler_params=pltpu.CompilerParams(
            dimension_semantics=("parallel",)),  # shards across v7x's 2 TCs
    )(y, ssum, ssq, gamma, beta)
    return out[:m_true]


def conv_bn_lrelu_cls(cols, w, gamma, beta, cls_w, cls_b):
    """Joint conv block with the 1x1 classifier fused into pass 2."""
    cols, m_true, tm, m_pad = _tile_rows(cols)
    cout = w.shape[1]
    grid = (m_pad // tm,)

    y, ssum, ssq = _pass1_matmul_stats(cols, w, tm, grid)

    out = pl.pallas_call(
        functools.partial(_bn_lrelu_cls_kernel, inv_m=1.0 / float(m_true)),
        out_shape=jax.ShapeDtypeStruct((m_pad, 1), jnp.float32),
        grid=grid,
        in_specs=[pl.BlockSpec((tm, cout), lambda i: (i, 0)),
                  pl.BlockSpec((1, cout), lambda i: (0, 0)),
                  pl.BlockSpec((1, cout), lambda i: (0, 0)),
                  pl.BlockSpec((1, cout), lambda i: (0, 0)),
                  pl.BlockSpec((1, cout), lambda i: (0, 0)),
                  pl.BlockSpec((1, cout), lambda i: (0, 0)),   # cls_w (1, Cout)
                  pl.BlockSpec((1, 1), lambda i: (0, 0))],     # cls_b (1, 1)
        out_specs=pl.BlockSpec((tm, 1), lambda i: (i, 0)),
        compiler_params=pltpu.CompilerParams(
            dimension_semantics=("parallel",)),
    )(y, ssum, ssq, gamma, beta, cls_w, cls_b)
    return out[:m_true]


# ---------------------------------------------------------------------------
# Plain-JAX glue: im2col / weight layout
# ---------------------------------------------------------------------------
def _im2col(x_nhwc, kh, kw, stride, pad):
    """Extract conv patches -> (N*Ho*Wo, kh*kw*C). Input already bf16."""
    x = jnp.pad(x_nhwc, ((0, 0), (pad, pad), (pad, pad), (0, 0)))
    n, h, w, c = x.shape
    ho = (h - kh) // stride + 1
    wo = (w - kw) // stride + 1
    patches = []
    for i in range(kh):
        for j in range(kw):
            patches.append(x[:, i:i + stride * ho:stride, j:j + stride * wo:stride, :])
    cols = jnp.stack(patches, axis=3)  # (N, Ho, Wo, kh*kw, C)
    return cols.reshape(n * ho * wo, kh * kw * c), (n, ho, wo)


def _w_to_matrix(w_oihw):
    """PyTorch (Cout,Cin,KH,KW) -> (KH*KW*Cin, Cout) bf16; matches _im2col order."""
    cout, cin, kh, kw = w_oihw.shape
    return jnp.transpose(w_oihw, (2, 3, 1, 0)).reshape(kh * kw * cin, cout).astype(jnp.bfloat16)


# ---------------------------------------------------------------------------
# Module
# ---------------------------------------------------------------------------
class CondPatchDiscriminatorPallas:
    def __init__(self, key, cond_dim=8):
        self.cond_dim = cond_dim
        # cnn backbone: 'I3,C4-32-2,C4-64-2'  (conv bias dropped: cancelled by BN)
        cnn_defs = [(3, 32, 4, 2, 1), (32, 64, 4, 2, 1)]
        output_dim = cnn_defs[-1][1]

        keys = jax.random.split(key, len(cnn_defs) + 2)
        self.cnn_layers = []
        for idx, (cin, cout, k, s, p) in enumerate(cnn_defs):
            w = 0.05 * jax.random.normal(keys[idx], (cout, cin, k, k), jnp.float32)
            gamma = jnp.ones((1, cout), jnp.float32)
            beta = jnp.zeros((1, cout), jnp.float32)
            self.cnn_layers.append((_w_to_matrix(w), gamma, beta, k, s, p))

        # joint_conv: Conv2d(output_dim + cond_dim, output_dim, 3, 1, 1, bias=False) + BN + LReLU
        jw = 0.05 * jax.random.normal(
            keys[-2], (output_dim, output_dim + cond_dim, 3, 3), jnp.float32)
        self.joint_w = _w_to_matrix(jw)
        self.joint_gamma = jnp.ones((1, output_dim), jnp.float32)
        self.joint_beta = jnp.zeros((1, output_dim), jnp.float32)

        # classifier: Conv2d(output_dim, 1, kernel_size=1, stride=1) with bias.
        # Stored as a (1, output_dim) row vector for the fused epilogue reduce.
        cw = 0.05 * jax.random.normal(keys[-1], (1, output_dim), jnp.float32)
        self.cls_w = cw.astype(jnp.float32)
        self.cls_b = jnp.full((1, 1), 0.1, jnp.float32)

    def __call__(self, x_nchw, cond_vecs):
        # ---- cnn backbone ----
        x = jnp.transpose(x_nchw, (0, 2, 3, 1)).astype(jnp.bfloat16)  # NCHW -> NHWC, bf16
        for (w, g, be, k, s, p) in self.cnn_layers:
            cols, (n, ho, wo) = _im2col(x, k, k, s, p)
            y = conv_bn_lrelu(cols, w, g, be)
            x = y.reshape(n, ho, wo, -1)

        # ---- cond vector broadcast + concat (mirrors PyTorch forward) ----
        # PyTorch's `len(cond_vecs) == 2` (dim-0 size) check only makes sense for
        # batch==2 with 2-D cond vecs; generalize by rank so any batch works.
        if cond_vecs.ndim == 2:
            cond_vecs = cond_vecs.reshape(-1, cond_vecs.shape[1], 1, 1)
        n, hf, wf, _ = x.shape
        cond_nhwc = jnp.broadcast_to(
            jnp.transpose(cond_vecs, (0, 2, 3, 1)).astype(jnp.bfloat16),
            (n, hf, wf, cond_vecs.shape[1]))
        x = jnp.concatenate([x, cond_nhwc], axis=-1)

        # ---- joint_conv (+ fused 1x1 classifier epilogue) ----
        cols, (n, ho, wo) = _im2col(x, 3, 3, 1, 1)
        y = conv_bn_lrelu_cls(cols, self.joint_w, self.joint_gamma, self.joint_beta,
                              self.cls_w, self.cls_b)
        out = y.reshape(n, ho, wo, 1)
        return jnp.transpose(out, (0, 3, 1, 2))  # NHWC -> NCHW, (N, 1, Hf, Wf)


# ---------------------------------------------------------------------------
if __name__ == "__main__":
    key = jax.random.PRNGKey(0)
    k_param, k_x, k_c = jax.random.split(key, 3)

    model = CondPatchDiscriminatorPallas(k_param, cond_dim=8)

    # small shapes consistent with the module: NCHW image, (N, cond_dim) cond vecs
    x = jax.random.normal(k_x, (2, 3, 16, 16), jnp.float32)
    cond = jax.random.normal(k_c, (2, 8), jnp.float32)

    out = model(x, cond)
    out = jax.block_until_ready(out)
    assert out.shape == (2, 1, 4, 4), out.shape
    assert bool(jnp.all(jnp.isfinite(out)))
    print("KERNEL_OK")
</pallas_src>

<mosaic_0001>
module attributes {stable_mosaic.version = 11 : i64} {
  func.func @_matmul_stats_kernel(%arg0: i32, %arg1: memref<128x48xbf16, #tpu.memory_space<vmem>>, %arg2: memref<48x32xbf16, #tpu.memory_space<vmem>>, %arg3: memref<128x32xbf16, #tpu.memory_space<vmem>>, %arg4: memref<1x32xf32, #tpu.memory_space<vmem>>, %arg5: memref<1x32xf32, #tpu.memory_space<vmem>>) attributes {dimension_semantics = [#tpu.dimension_semantics<arbitrary>], iteration_bounds = array<i64: 1>, scalar_prefetch = 0 : i64, scratch_operands = 0 : i64, tpu.core_type = #tpu.core_type<tc>, window_params = [{transform_indices = @transform_0, window_bounds = array<i64: 128, 48>}, {pipeline_mode = #tpu.pipeline_mode<synchronous>, transform_indices = @transform_1, window_bounds = array<i64: 48, 32>}, {transform_indices = @transform_2, window_bounds = array<i64: 128, 32>}, {pipeline_mode = #tpu.pipeline_mode<synchronous>, transform_indices = @transform_3, window_bounds = array<i64: 1, 32>}, {pipeline_mode = #tpu.pipeline_mode<synchronous>, transform_indices = @transform_4, window_bounds = array<i64: 1, 32>}]} {
    %c0_i32 = arith.constant 0 : i32
    %0 = arith.cmpi eq, %arg0, %c0_i32 : i32
    %1 = arith.extui %0 : i1 to i32
    %c0_i32_0 = arith.constant 0 : i32
    %2 = arith.cmpi ne, %1, %c0_i32_0 : i32
    scf.if %2 {
      %cst_16 = arith.constant 0.000000e+00 : f32
      %19 = vector.broadcast %cst_16 : f32 to vector<1x32xf32>
      %c0_17 = arith.constant 0 : index
      %c0_18 = arith.constant 0 : index
      %20 = vector.load %arg4[%c0_17, %c0_18] : memref<1x32xf32, #tpu.memory_space<vmem>>, vector<1x32xf32>
      tpu.vector_store %arg4[%c0_17, %c0_18], %19 {strides = array<i32>} : memref<1x32xf32, #tpu.memory_space<vmem>>, vector<1x32xf32>,
      %cst_19 = arith.constant 0.000000e+00 : f32
      %21 = vector.broadcast %cst_19 : f32 to vector<1x32xf32>
      %c0_20 = arith.constant 0 : index
      %c0_21 = arith.constant 0 : index
      %22 = vector.load %arg5[%c0_20, %c0_21] : memref<1x32xf32, #tpu.memory_space<vmem>>, vector<1x32xf32>
      tpu.vector_store %arg5[%c0_20, %c0_21], %21 {strides = array<i32>} : memref<1x32xf32, #tpu.memory_space<vmem>>, vector<1x32xf32>,
    } else {
    }
    %c0 = arith.constant 0 : index
    %c0_1 = arith.constant 0 : index
    %3 = vector.load %arg1[%c0, %c0_1] : memref<128x48xbf16, #tpu.memory_space<vmem>>, vector<128x48xbf16>
    %c0_2 = arith.constant 0 : index
    %c0_3 = arith.constant 0 : index
    %4 = vector.load %arg2[%c0_2, %c0_3] : memref<48x32xbf16, #tpu.memory_space<vmem>>, vector<48x32xbf16>
    %cst = arith.constant dense<0.000000e+00> : vector<128x32xf32>
    %5 = tpu.matmul %3, %4, %cst {dimension_numbers = #tpu.dot_dimension_numbers<[1], [0], [0], [1], [0, 0, 1, 1], [], []>} : vector<128x48xbf16>, vector<48x32xbf16>, vector<128x32xf32> -> vector<128x32xf32>
    %6 = arith.truncf %5 : vector<128x32xf32> to vector<128x32xbf16>
    %c0_4 = arith.constant 0 : index
    %c0_5 = arith.constant 0 : index
    %7 = vector.load %arg3[%c0_4, %c0_5] : memref<128x32xbf16, #tpu.memory_space<vmem>>, vector<128x32xbf16>
    tpu.vector_store %arg3[%c0_4, %c0_5], %6 {strides = array<i32>} : memref<128x32xbf16, #tpu.memory_space<vmem>>, vector<128x32xbf16>,
    %c0_6 = arith.constant 0 : index
    %c0_7 = arith.constant 0 : index
    %8 = vector.load %arg4[%c0_6, %c0_7] : memref<1x32xf32, #tpu.memory_space<vmem>>, vector<1x32xf32>
    %cst_8 = arith.constant dense<0.000000e+00> : vector<32xf32>
    %9 = vector.multi_reduction <add>, %5, %cst_8 [0] : vector<128x32xf32> to vector<32xf32>
    %10 = vector.shape_cast %9 : vector<32xf32> to vector<1x32xf32>
    %11 = arith.addf %8, %10 : vector<1x32xf32>
    %c0_9 = arith.constant 0 : index
    %c0_10 = arith.constant 0 : index
    %12 = vector.load %arg4[%c0_9, %c0_10] : memref<1x32xf32, #tpu.memory_space<vmem>>, vector<1x32xf32>
    tpu.vector_store %arg4[%c0_9, %c0_10], %11 {strides = array<i32>} : memref<1x32xf32, #tpu.memory_space<vmem>>, vector<1x32xf32>,
    %c0_11 = arith.constant 0 : index
    %c0_12 = arith.constant 0 : index
    %13 = vector.load %arg5[%c0_11, %c0_12] : memref<1x32xf32, #tpu.memory_space<vmem>>, vector<1x32xf32>
    %14 = arith.mulf %5, %5 : vector<128x32xf32>
    %cst_13 = arith.constant dense<0.000000e+00> : vector<32xf32>
    %15 = vector.multi_reduction <add>, %14, %cst_13 [0] : vector<128x32xf32> to vector<32xf32>
    %16 = vector.shape_cast %15 : vector<32xf32> to vector<1x32xf32>
    %17 = arith.addf %13, %16 : vector<1x32xf32>
    %c0_14 = arith.constant 0 : index
    %c0_15 = arith.constant 0 : index
    %18 = vector.load %arg5[%c0_14, %c0_15] : memref<1x32xf32, #tpu.memory_space<vmem>>, vector<1x32xf32>
    tpu.vector_store %arg5[%c0_14, %c0_15], %17 {strides = array<i32>} : memref<1x32xf32, #tpu.memory_space<vmem>>, vector<1x32xf32>,
    return
  }
  func.func @transform_0(%arg0: i32) -> (i32, i32) {
    %c0_i32 = arith.constant 0 : i32
    %c0_i32_0 = arith.constant 0 : i32
    return %arg0, %c0_i32 : i32, i32
  }
  func.func @transform_1(%arg0: i32) -> (i32, i32) {
    %c0_i32 = arith.constant 0 : i32
    %c0_i32_0 = arith.constant 0 : i32
    %c0_i32_1 = arith.constant 0 : i32
    return %c0_i32, %c0_i32_0 : i32, i32
  }
  func.func @transform_2(%arg0: i32) -> (i32, i32) {
    %c0_i32 = arith.constant 0 : i32
    %c0_i32_0 = arith.constant 0 : i32
    return %arg0, %c0_i32 : i32, i32
  }
  func.func @transform_3(%arg0: i32) -> (i32, i32) {
    %c0_i32 = arith.constant 0 : i32
    %c0_i32_0 = arith.constant 0 : i32
    %c0_i32_1 = arith.constant 0 : i32
    return %c0_i32, %c0_i32_0 : i32, i32
  }
  func.func @transform_4(%arg0: i32) -> (i32, i32) {
    %c0_i32 = arith.constant 0 : i32
    %c0_i32_0 = arith.constant 0 : i32
    %c0_i32_1 = arith.constant 0 : i32
    return %c0_i32, %c0_i32_0 : i32, i32
  }
}

</mosaic_0001>

<llo_original>
// kernel: tpu_custom_call.1
$region0: #{tpu_custom_call.1}
  #allocation0 [shape = 'u32[]', space=smem, size = 0x4, offset = 0x4, fixed_abs, tag = 'smem constant byte address 0x4 - core index']
  #allocation1 [shape = 'u32[144,128]{1,0:T(1,128)}', space=vmem, size = 0x12000, scoped, tag = 'internal scratch']
  %s0 = inlined_call_operand.vmem [shape: bf16[128,48], index: 0, kind: input, shape index: {}]
  %s1 = inlined_call_operand.vmem [shape: bf16[48,32], index: 1, kind: input, shape index: {}]
  %s2 = inlined_call_operand.vmem [shape: bf16[128,32], index: 2, kind: output, shape index: {0}]
  %s3 = inlined_call_operand.hbm [shape: f32[1,32], index: 3, kind: output, shape index: {1}]
  %s4 = inlined_call_operand.hbm [shape: f32[1,32], index: 4, kind: output, shape index: {2}]
  %5 = xla_tuple %s2, %s3, %s4
  %s6 = sld [smem:[#allocation0]]
  $region38: #{tpu_custom_call.1} parent=0
    _
  %s8 = ssub.s32 1, %s6
  %s9 = scalar_select 0, %s8, %s6
  $region1: #{tpu_custom_call.1} parent=0
    #allocation2 [shape = 'u8[512]{0}', space=vmem, size = 0x400, scoped, tag = 'output window, operand 1, single buffered']
    #allocation3 [shape = 's32[1]{0}', space=sflag, size = 0x4, scoped, tag = 'scoped memory for tpu_custom_call.1']
    #allocation4 [shape = 'u8[512]{0}', space=vmem, size = 0x400, scoped, tag = 'output window, operand 2, single buffered']
    #allocation5 [shape = 's32[1]{0}', space=sflag, size = 0x4, scoped, tag = 'scoped memory for tpu_custom_call.1']
    %10 = vsyncpa [#allocation3], 0
    %11 = vsyncpa [#allocation5], 0
    // Predicated region
    $region2: #{tpu_custom_call.1} parent=1 // pred_check
      _
    $region3: #{tpu_custom_call.1} parent=1 // pred_check_branch
      %13 = sbr.rel (0) target = $region5
    $region4: #{tpu_custom_call.1} parent=1 // pred_region
      _
    $region5: #{tpu_custom_call.1} parent=1 // pred_fallthru
      _
    // Predicated region
    $region6: #{tpu_custom_call.1} parent=1 // pred_check
      _
    $region7: #{tpu_custom_call.1} parent=1 // pred_check_branch
      %15 = sbr.rel (0) target = $region9
    $region8: #{tpu_custom_call.1} parent=1 // pred_region
      _
    $region9: #{tpu_custom_call.1} parent=1 // pred_fallthru
      _
    %p17 = scmp.eq.s32.totalorder 0, 0
    // Predicated region
    $region10: #{tpu_custom_call.1} parent=1 // pred_check
      %p18 = pneg %p17
    $region11: #{tpu_custom_call.1} parent=1 // pred_check_branch
      %20 = sbr.rel (%p18) target = $region13
    $region12: #{tpu_custom_call.1} parent=1 // pred_region
      %vm21 = vcmask 253952
      %22 = vst.msk [vmem:[#allocation2] sm:$0x1] %vm21, 0.0
      %23 = vst.msk [vmem:[#allocation4] sm:$0x1] %vm21, 0.0
    $region13: #{tpu_custom_call.1} parent=1 // pred_fallthru
      _
    %v24 = vld [vmem:[%s0] sm:$0xf]
    %v25 = vld [vmem:[%s0 + $0x4] sm:$0xf]
    %v26 = vld [vmem:[%s0 + $0x8] sm:$0xf]
    %v27 = vld [vmem:[%s0 + $0xc] sm:$0xf]
    %v28 = vld [vmem:[%s0 + $0x10] sm:$0xf]
    %v29 = vld [vmem:[%s0 + $0x14] sm:$0xf]
    %v30 = vld [vmem:[%s0 + $0x18] sm:$0xf]
    %v31 = vld [vmem:[%s0 + $0x1c] sm:$0xf]
    %v32 = vld [vmem:[%s0 + $0x20] sm:$0xf]
    %v33 = vld [vmem:[%s0 + $0x24] sm:$0xf]
    %v34 = vld [vmem:[%s0 + $0x28] sm:$0xf]
    %v35 = vld [vmem:[%s0 + $0x2c] sm:$0xf]
    %v36 = vld [vmem:[%s0 + $0x30] sm:$0xf]
    %v37 = vld [vmem:[%s0 + $0x34] sm:$0xf]
    %v38 = vld [vmem:[%s0 + $0x38] sm:$0xf]
    %v39 = vld [vmem:[%s0 + $0x3c] sm:$0xf]
    %v40 = vld [vmem:[%s1] sm:$0xf]
    %v41 = vld [vmem:[%s1 + $0x4] sm:$0xf]
    %v42 = vld [vmem:[%s1 + $0x8] sm:$0xf]
    %v43 = vld [vmem:[%s1 + $0xc] sm:$0xf]
    %v44 = vld [vmem:[%s1 + $0x10] sm:$0xf]
    %v45 = vld [vmem:[%s1 + $0x14] sm:$0xf]
    %v62 = vunpack.c.l.b16 %v24
    %v63 = vunpack.c.l.b16 %v25
    %v64 = vunpack.c.l.b16 %v26
    %v65 = vunpack.c.l.b16 %v27
    %v66 = vunpack.c.l.b16 %v28
    %v67 = vunpack.c.l.b16 %v29
    %v68 = vunpack.c.l.b16 %v30
    %v69 = vunpack.c.l.b16 %v31
    %v70 = vunpack.c.l.b16 %v32
    %v71 = vunpack.c.l.b16 %v33
    %v72 = vunpack.c.l.b16 %v34
    %v73 = vunpack.c.l.b16 %v35
    %v74 = vunpack.c.l.b16 %v36
    %v75 = vunpack.c.l.b16 %v37
    %v76 = vunpack.c.l.b16 %v38
    %v77 = vunpack.c.l.b16 %v39
    %v78 = vpack.c.b16 %v63, %v62
    %v79 = vpack.c.b16 %v65, %v64
    %v80 = vpack.c.b16 %v67, %v66
    %v81 = vpack.c.b16 %v69, %v68
    %v82 = vpack.c.b16 %v71, %v70
    %v83 = vpack.c.b16 %v73, %v72
    %v84 = vpack.c.b16 %v75, %v74
    %v85 = vpack.c.b16 %v77, %v76
    %v92 = vunpack.c.l.b16 %v40
    %v93 = vunpack.c.l.b16 %v41
    %v94 = vunpack.c.l.b16 %v42
    %v95 = vunpack.c.l.b16 %v43
    %v96 = vunpack.c.l.b16 %v44
    %v97 = vunpack.c.l.b16 %v45
    %v98 = vpack.c.b16 %v93, %v92
    %v99 = vpack.c.b16 %v95, %v94
    %v100 = vpack.c.b16 %v97, %v96
    %vm104 = vcmask 392192
    %v106 = vsel %vm104, %v78, 0
    %v109 = vsel %vm104, %v79, 0
    %v112 = vsel %vm104, %v80, 0
    %v115 = vsel %vm104, %v81, 0
    %v118 = vsel %vm104, %v82, 0
    %v121 = vsel %vm104, %v83, 0
    %v124 = vsel %vm104, %v84, 0
    %v127 = vsel %vm104, %v85, 0
    %129 = vmatprep.subr.bf16.mxu0 0
    %130 = vmatpush1.bf16.msra.mxu0 0
    %131 = vmatprep.subr.bf16.mxu0 0
    %132 = vmatpush1.bf16.msra.mxu0 0
    %133 = vmatprep.subr.bf16.mxu0 0
    %134 = vmatpush1.bf16.msra.mxu0 0
    %135 = vmatprep.subr.bf16.mxu0 0
    %136 = vmatpush1.bf16.msra.mxu0 0
    %137 = vmatprep.subr.bf16.mxu0 0
    %138 = vmatpush1.bf16.msra.mxu0 0
    %139 = vmatprep.subr.bf16.mxu0 0
    %140 = vmatpush1.bf16.msra.mxu0 %v100
    %141 = vmatprep.subr.bf16.mxu0 0
    %142 = vmatpush1.bf16.msra.mxu0 %v99
    %143 = vmatprep.subr.bf16.mxu0 0
    %144 = vmatpush1.bf16.msra.mxu0 %v98
    %145 = vmatprep.subr.bf16.mxu0 0
    %146 = vmatpush2.bf16.msra.mxu0 0
    %147 = vmatprep.subr.bf16.mxu0 0
    %148 = vmatpush2.bf16.msra.mxu0 0
    %149 = vmatprep.subr.bf16.mxu0 0
    %150 = vmatpush2.bf16.msra.mxu0 0
    %151 = vmatprep.subr.bf16.mxu0 0
    %152 = vmatpush2.bf16.msra.mxu0 0
    %153 = vmatprep.subr.bf16.mxu0 0
    %154 = vmatpush2.bf16.msra.mxu0 0
    %155 = vmatprep.subr.bf16.mxu0 0
    %156 = vmatpush2.bf16.msra.mxu0 0
    %157 = vmatprep.subr.bf16.mxu0 0
    %158 = vmatpush2.bf16.msra.mxu0 0
    %159 = vmatprep.subr.bf16.mxu0 0
    %160 = vmatpush2.bf16.msra.mxu0 0
    %161 = vmatprep.mubr.bf16.mxu0 0
    %162 = vmatmul.mubr.bf16.gmra.mxu0 %v106
    %v163 = vpop.f32.mrf.mxu0
    %v164 = vadd.f32 0.0, %v163
    %v165 = vpop.f32.mrf.mxu0
    %v166 = vpop.f32.mrf.mxu0
    %v167 = vadd.f32 0.0, %v166
    %v168 = vpop.f32.mrf.mxu0
    %169 = vmatprep.mubr.bf16.mxu0 0
    %170 = vmatmul.mubr.bf16.gmra.mxu0 %v109
    %v171 = vpop.f32.mrf.mxu0
    %v172 = vadd.f32 0.0, %v171
    %v173 = vpop.f32.mrf.mxu0
    %v174 = vpop.f32.mrf.mxu0
    %v175 = vadd.f32 0.0, %v174
    %v176 = vpop.f32.mrf.mxu0
    %177 = vmatprep.mubr.bf16.mxu0 0
    %178 = vmatmul.mubr.bf16.gmra.mxu0 %v112
    %v179 = vpop.f32.mrf.mxu0
    %v180 = vadd.f32 0.0, %v179
    %v181 = vpop.f32.mrf.mxu0
    %v182 = vpop.f32.mrf.mxu0
    %v183 = vadd.f32 0.0, %v182
    %v184 = vpop.f32.mrf.mxu0
    %185 = vmatprep.mubr.bf16.mxu0 0
    %186 = vmatmul.mubr.bf16.gmra.mxu0 %v115
    %v187 = vpop.f32.mrf.mxu0
    %v188 = vadd.f32 0.0, %v187
    %v189 = vpop.f32.mrf.mxu0
    %v190 = vpop.f32.mrf.mxu0
    %v191 = vadd.f32 0.0, %v190
    %v192 = vpop.f32.mrf.mxu0
    %193 = vmatprep.mubr.bf16.mxu0 0
    %194 = vmatmul.mubr.bf16.gmra.mxu0 %v118
    %v195 = vpop.f32.mrf.mxu0
    %v196 = vadd.f32 0.0, %v195
    %v197 = vpop.f32.mrf.mxu0
    %v198 = vpop.f32.mrf.mxu0
    %v199 = vadd.f32 0.0, %v198
    %v200 = vpop.f32.mrf.mxu0
    %201 = vmatprep.mubr.bf16.mxu0 0
    %202 = vmatmul.mubr.bf16.gmra.mxu0 %v121
    %v203 = vpop.f32.mrf.mxu0
    %v204 = vadd.f32 0.0, %v203
    %v205 = vpop.f32.mrf.mxu0
    %v206 = vpop.f32.mrf.mxu0
    %v207 = vadd.f32 0.0, %v206
    %v208 = vpop.f32.mrf.mxu0
    %209 = vmatprep.mubr.bf16.mxu0 0
    %210 = vmatmul.mubr.bf16.gmra.mxu0 %v124
    %v211 = vpop.f32.mrf.mxu0
    %v212 = vadd.f32 0.0, %v211
    %v213 = vpop.f32.mrf.mxu0
    %v214 = vpop.f32.mrf.mxu0
    %v215 = vadd.f32 0.0, %v214
    %v216 = vpop.f32.mrf.mxu0
    %217 = vmatprep.mubr.bf16.mxu0 0
    %218 = vmatmul.mubr.bf16.gmra.mxu0 %v127
    %v219 = vpop.f32.mrf.mxu0
    %v220 = vadd.f32 0.0, %v219
    %v221 = vpop.f32.mrf.mxu0
    %v222 = vpop.f32.mrf.mxu0
    %v223 = vadd.f32 0.0, %v222
    %v224 = vpop.f32.mrf.mxu0
    %225 = vdwg.mxu0
    %v226 = vpack.c.bf16 %v167, %v164
    %v227 = vpack.c.bf16 %v175, %v172
    %v228 = vpack.c.bf16 %v183, %v180
    %v229 = vpack.c.bf16 %v191, %v188
    %v230 = vpack.c.bf16 %v199, %v196
    %v231 = vpack.c.bf16 %v207, %v204
    %v232 = vpack.c.bf16 %v215, %v212
    %v233 = vpack.c.bf16 %v223, %v220
    %v242 = vunpack.c.l.b16 %v226
    %v243 = vunpack.c.h.b16 %v226
    %v244 = vunpack.c.l.b16 %v227
    %v245 = vunpack.c.h.b16 %v227
    %v246 = vunpack.c.l.b16 %v228
    %v247 = vunpack.c.h.b16 %v228
    %v248 = vunpack.c.l.b16 %v229
    %v249 = vunpack.c.h.b16 %v229
    %v250 = vunpack.c.l.b16 %v230
    %v251 = vunpack.c.h.b16 %v230
    %v252 = vunpack.c.l.b16 %v231
    %v253 = vunpack.c.h.b16 %v231
    %v254 = vunpack.c.l.b16 %v232
    %v255 = vunpack.c.h.b16 %v232
    %v256 = vunpack.c.l.b16 %v233
    %v257 = vunpack.c.h.b16 %v233
    %v258 = vpack.c.b16 %v242, %v242
    %v259 = vpack.c.b16 %v243, %v243
    %v260 = vpack.c.b16 %v244, %v244
    %v261 = vpack.c.b16 %v245, %v245
    %v262 = vpack.c.b16 %v246, %v246
    %v263 = vpack.c.b16 %v247, %v247
    %v264 = vpack.c.b16 %v248, %v248
    %v265 = vpack.c.b16 %v249, %v249
    %v266 = vpack.c.b16 %v250, %v250
    %v267 = vpack.c.b16 %v251, %v251
    %v268 = vpack.c.b16 %v252, %v252
    %v269 = vpack.c.b16 %v253, %v253
    %v270 = vpack.c.b16 %v254, %v254
    %v271 = vpack.c.b16 %v255, %v255
    %v272 = vpack.c.b16 %v256, %v256
    %v273 = vpack.c.b16 %v257, %v257
    %vm290 = vcmask 257024
    %291 = vst.msk [vmem:[%s2] sm:$0xf] %vm290, %v258
    %292 = vst.msk [vmem:[%s2 + $0x4] sm:$0xf] %vm290, %v259
    %293 = vst.msk [vmem:[%s2 + $0x8] sm:$0xf] %vm290, %v260
    %294 = vst.msk [vmem:[%s2 + $0xc] sm:$0xf] %vm290, %v261
    %295 = vst.msk [vmem:[%s2 + $0x10] sm:$0xf] %vm290, %v262
    %296 = vst.msk [vmem:[%s2 + $0x14] sm:$0xf] %vm290, %v263
    %297 = vst.msk [vmem:[%s2 + $0x18] sm:$0xf] %vm290, %v264
    %298 = vst.msk [vmem:[%s2 + $0x1c] sm:$0xf] %vm290, %v265
    %299 = vst.msk [vmem:[%s2 + $0x20] sm:$0xf] %vm290, %v266
    %300 = vst.msk [vmem:[%s2 + $0x24] sm:$0xf] %vm290, %v267
    %301 = vst.msk [vmem:[%s2 + $0x28] sm:$0xf] %vm290, %v268
    %302 = vst.msk [vmem:[%s2 + $0x2c] sm:$0xf] %vm290, %v269
    %303 = vst.msk [vmem:[%s2 + $0x30] sm:$0xf] %vm290, %v270
    %304 = vst.msk [vmem:[%s2 + $0x34] sm:$0xf] %vm290, %v271
    %305 = vst.msk [vmem:[%s2 + $0x38] sm:$0xf] %vm290, %v272
    %306 = vst.msk [vmem:[%s2 + $0x3c] sm:$0xf] %vm290, %v273
    %v307 = vld [vmem:[#allocation2] sm:$0x1]
    %vm308 = vcmask 261120
    %v309 = vsel %vm308, %v164, 0.0
    %v310 = vsel %vm308, %v167, 0.0
    %v311 = vadd.f32 %v309, %v310
    %v312 = vsel %vm308, %v172, 0.0
    %v313 = vadd.f32 %v311, %v312
    %v314 = vsel %vm308, %v175, 0.0
    %v315 = vadd.f32 %v313, %v314
    %v316 = vsel %vm308, %v180, 0.0
    %v317 = vadd.f32 %v315, %v316
    %v318 = vsel %vm308, %v183, 0.0
    %v319 = vadd.f32 %v317, %v318
    %v320 = vsel %vm308, %v188, 0.0
    %v321 = vadd.f32 %v319, %v320
    %v322 = vsel %vm308, %v191, 0.0
    %v323 = vadd.f32 %v321, %v322
    %v324 = vsel %vm308, %v196, 0.0
    %v325 = vadd.f32 %v323, %v324
    %v326 = vsel %vm308, %v199, 0.0
    %v327 = vadd.f32 %v325, %v326
    %v328 = vsel %vm308, %v204, 0.0
    %v329 = vadd.f32 %v327, %v328
    %v330 = vsel %vm308, %v207, 0.0
    %v331 = vadd.f32 %v329, %v330
    %v332 = vsel %vm308, %v212, 0.0
    %v333 = vadd.f32 %v331, %v332
    %v334 = vsel %vm308, %v215, 0.0
    %v335 = vadd.f32 %v333, %v334
    %v336 = vsel %vm308, %v220, 0.0
    %v337 = vadd.f32 %v335, %v336
    %v338 = vsel %vm308, %v223, 0.0
    %v339 = vadd.f32 %v337, %v338
    %v340 = vrot.slane %v339, 4
    %v341 = vadd.f32 %v339, %v340
    %v342 = vrot.slane %v341, 2
    %v343 = vadd.f32 %v341, %v342
    %v344 = vrot.slane %v343, 1
    %v345 = vadd.f32 %v343, %v344
    %v346 = vadd.f32 %v307, %v345
    %vm347 = vcmask 253952
    %348 = vst.msk [vmem:[#allocation2] sm:$0x1] %vm347, %v346
    %v349 = vld [vmem:[#allocation4] sm:$0x1]
    %v350 = vmul.f32 %v164, %v164
    %v351 = vmul.f32 %v167, %v167
    %v352 = vmul.f32 %v172, %v172
    %v353 = vmul.f32 %v175, %v175
    %v354 = vmul.f32 %v180, %v180
    %v355 = vmul.f32 %v183, %v183
    %v356 = vmul.f32 %v188, %v188
    %v357 = vmul.f32 %v191, %v191
    %v358 = vmul.f32 %v196, %v196
    %v359 = vmul.f32 %v199, %v199
    %v360 = vmul.f32 %v204, %v204
    %v361 = vmul.f32 %v207, %v207
    %v362 = vmul.f32 %v212, %v212
    %v363 = vmul.f32 %v215, %v215
    %v364 = vmul.f32 %v220, %v220
    %v365 = vmul.f32 %v223, %v223
    %v366 = vsel %vm308, %v350, 0.0
    %v367 = vsel %vm308, %v351, 0.0
    %v368 = vadd.f32 %v366, %v367
    %v369 = vsel %vm308, %v352, 0.0
    %v370 = vadd.f32 %v368, %v369
    %v371 = vsel %vm308, %v353, 0.0
    %v372 = vadd.f32 %v370, %v371
    %v373 = vsel %vm308, %v354, 0.0
    %v374 = vadd.f32 %v372, %v373
    %v375 = vsel %vm308, %v355, 0.0
    %v376 = vadd.f32 %v374, %v375
    %v377 = vsel %vm308, %v356, 0.0
    %v378 = vadd.f32 %v376, %v377
    %v379 = vsel %vm308, %v357, 0.0
    %v380 = vadd.f32 %v378, %v379
    %v381 = vsel %vm308, %v358, 0.0
    %v382 = vadd.f32 %v380, %v381
    %v383 = vsel %vm308, %v359, 0.0
    %v384 = vadd.f32 %v382, %v383
    %v385 = vsel %vm308, %v360, 0.0
    %v386 = vadd.f32 %v384, %v385
    %v387 = vsel %vm308, %v361, 0.0
    %v388 = vadd.f32 %v386, %v387
    %v389 = vsel %vm308, %v362, 0.0
    %v390 = vadd.f32 %v388, %v389
    %v391 = vsel %vm308, %v363, 0.0
    %v392 = vadd.f32 %v390, %v391
    %v393 = vsel %vm308, %v364, 0.0
    %v394 = vadd.f32 %v392, %v393
    %v395 = vsel %vm308, %v365, 0.0
    %v396 = vadd.f32 %v394, %v395
    %v397 = vrot.slane %v396, 4
    %v398 = vadd.f32 %v396, %v397
    %v399 = vrot.slane %v398, 2
    %v400 = vadd.f32 %v398, %v399
    %v401 = vrot.slane %v400, 1
    %v402 = vadd.f32 %v400, %v401
    %v403 = vadd.f32 %v349, %v402
    %404 = vst.msk [vmem:[#allocation4] sm:$0x1] %vm347, %v403
    // Predicated region
    $region14: #{tpu_custom_call.1} parent=1 // pred_check
      _
    $region15: #{tpu_custom_call.1} parent=1 // pred_check_branch
      %406 = sbr.rel (0) target = $region17
    $region16: #{tpu_custom_call.1} parent=1 // pred_region
      _
    $region17: #{tpu_custom_call.1} parent=1 // pred_fallthru
      _
    // Predicated region
    $region18: #{tpu_custom_call.1} parent=1 // pred_check
      _
    $region19: #{tpu_custom_call.1} parent=1 // pred_check_branch
      %408 = sbr.rel (0) target = $region21
    $region20: #{tpu_custom_call.1} parent=1 // pred_region
      %s410 = ssub.s32 16, 16
      %411 = vsyncadd [#allocation3], %s410
      %s413 = sshll.u32 [#allocation2], 4
      %s414 = int_to_ptr.vmem [resolvable:$true] %s413
      %416 = dma.vmem_to_hbm [thread:$0]  %s414, 16, %s3, [#allocation3]
    $region21: #{tpu_custom_call.1} parent=1 // pred_fallthru
      _
    // Predicated region
    $region22: #{tpu_custom_call.1} parent=1 // pred_check
      _
    $region23: #{tpu_custom_call.1} parent=1 // pred_check_branch
      %418 = sbr.rel (0) target = $region25
    $region24: #{tpu_custom_call.1} parent=1 // pred_region
      %s420 = ssub.s32 16, 16
      %421 = vsyncadd [#allocation5], %s420
      %s423 = sshll.u32 [#allocation4], 4
      %s424 = int_to_ptr.vmem [resolvable:$true] %s423
      %426 = dma.vmem_to_hbm [thread:$0]  %s424, 16, %s4, [#allocation5]
    $region25: #{tpu_custom_call.1} parent=1 // pred_fallthru
      _
    // Predicated region
    $region26: #{tpu_custom_call.1} parent=1 // pred_check
      _
    $region27: #{tpu_custom_call.1} parent=1 // pred_check_branch
      %428 = sbr.rel (0) target = $region29
    $region28: #{tpu_custom_call.1} parent=1 // pred_region
      _
    $region29: #{tpu_custom_call.1} parent=1 // pred_fallthru
      _
    // Predicated region
    $region30: #{tpu_custom_call.1} parent=1 // pred_check
      _
    $region31: #{tpu_custom_call.1} parent=1 // pred_check_branch
      %430 = sbr.rel (0) target = $region33
    $region32: #{tpu_custom_call.1} parent=1 // pred_region
      %431 = dma.done [#allocation3], 16
    $region33: #{tpu_custom_call.1} parent=1 // pred_fallthru
      _
    // Predicated region
    $region34: #{tpu_custom_call.1} parent=1 // pred_check
      _
    $region35: #{tpu_custom_call.1} parent=1 // pred_check_branch
      %433 = sbr.rel (0) target = $region37
    $region36: #{tpu_custom_call.1} parent=1 // pred_region
      %434 = dma.done [#allocation5], 16
    $region37: #{tpu_custom_call.1} parent=1 // pred_fallthru
      _
    %435 = vsyncpa [#allocation3], 1
    %436 = vsyncpa [#allocation5], 1

</llo_original>
